<compile_context>
chip_gen: v7x
topology: tpu7x:2x2x1
jax: 0.10.0
libtpu: 0.0.40
codegen_flags: <defaults>
</compile_context>

<pallas_src>
import functools

import jax
import jax.numpy as jnp
from jax.experimental import pallas as pl
from jax.experimental.pallas import tpu as pltpu


def _round_up(x, m):
    return ((x + m - 1) // m) * m


def conv_bn_swish_kernel(x_ref, w_ref, bias_ref, o_ref, col_ref, *,
                         N, KH, KW, W, cin_pad, out_lanes):
    """Fused KxK conv (stride 1, no pad) + folded BN + swish, whole batch.

    x_ref:    (N, Cin_pad, HW_pad)        VMEM  flattened, zero-padded images
    w_ref:    (Cout, KH*KW*Cin_pad)       VMEM  BN scale folded, (kh,kw,cin)
    bias_ref: (Cout, 1)                   VMEM  beta - mean * scale
    o_ref:    (N, Cout, out_lanes)        VMEM  lane-dense (multiple of 128)
    col_ref:  (KH*KW*Cin_pad, out_lanes)  VMEM scratch (im2col slab)
    """
    w = w_ref[...]
    bias = bias_ref[...]
    for n in range(N):                       # static unroll, one invocation
        # im2col via lane-shifted slices of the flattened image; every write
        # is a full 8-sublane group (cin_pad = 8, f32): no concat, no
        # cross-lane compaction.
        for kh in range(KH):
            for kw in range(KW):
                tap = kh * KW + kw
                off = kh * W + kw
                col_ref[tap * cin_pad:(tap + 1) * cin_pad, :] = (
                    x_ref[n, :, off:off + out_lanes])
        # One MXU matmul per image: (Cout, K) @ (K, out_lanes), f32 accumulate.
        acc = jnp.dot(w, col_ref[...], preferred_element_type=jnp.float32)
        y = acc + bias                       # folded-BN shift (lane broadcast)
        # Swish: exp lands on the EUP slot; exact reciprocal kept for accuracy.
        y = y * pl.reciprocal(1.0 + jnp.exp(-y), approx=False)
        o_ref[n] = y.astype(o_ref.dtype)     # unmasked full-width stores


def conv_bn_swish(x_nchw, w_oihw, bn_scale, bn_bias):
    """x_nchw: (N, Cin, H, W);  w_oihw: (Cout, Cin, KH, KW) (PyTorch layout)."""
    N, Cin, H, W = x_nchw.shape
    Cout, _, KH, KW = w_oihw.shape
    OH, OW = H - KH + 1, W - KW + 1              # stride=1, padding=0

    cin_pad = _round_up(Cin, 8)                  # sublane-group-aligned slab
    out_lanes = _round_up(OH * W, 128)           # lane-dense output width
    assert out_lanes % W == 0, "lane padding must be a whole number of rows"
    hw_pad = _round_up((KH - 1) * W + (KW - 1) + out_lanes, 128)

    # Flatten + zero-pad the input: (N, Cin_pad, HW_pad), lane-dense rows.
    x_flat = jnp.zeros((N, cin_pad, hw_pad), x_nchw.dtype)
    x_flat = x_flat.at[:, :Cin, :H * W].set(x_nchw.reshape(N, Cin, H * W))

    # Weights -> (Cout, KH*KW*Cin_pad); K ordered (kh, kw, cin_pad) to match
    # the in-kernel slab, zeros in the padded cin rows, BN scale folded in.
    w_pad = jnp.zeros((Cout, KH, KW, cin_pad), jnp.float32)
    w_pad = w_pad.at[:, :, :, :Cin].set(
        jnp.transpose(w_oihw, (0, 2, 3, 1)).astype(jnp.float32))
    w_flat = (w_pad.reshape(Cout, KH * KW * cin_pad)
              * bn_scale[:, None].astype(jnp.float32))
    bias2d = bn_bias.reshape(Cout, 1).astype(jnp.float32)

    kernel = functools.partial(
        conv_bn_swish_kernel, N=N, KH=KH, KW=KW, W=W,
        cin_pad=cin_pad, out_lanes=out_lanes)

    out_flat = pl.pallas_call(
        kernel,
        out_shape=jax.ShapeDtypeStruct((N, Cout, out_lanes), x_nchw.dtype),
        # No grid: whole batch in one step, full arrays resident in VMEM.
        in_specs=[
            pl.BlockSpec(memory_space=pltpu.MemorySpace.VMEM),
            pl.BlockSpec(memory_space=pltpu.MemorySpace.VMEM),
            pl.BlockSpec(memory_space=pltpu.MemorySpace.VMEM),
        ],
        out_specs=pl.BlockSpec(memory_space=pltpu.MemorySpace.VMEM),
        scratch_shapes=[
            pltpu.VMEM((KH * KW * cin_pad, out_lanes), jnp.float32),
        ],
    )(x_flat, w_flat, bias2d)

    # Drop the lane padding: (N, Cout, out_lanes) -> (N, Cout, OH, OW).
    return out_flat.reshape(N, Cout, out_lanes // W, W)[:, :, :OH, :OW]


def reference(x_nchw, w_oihw, bn_scale, bn_bias):
    """Pure-JAX reference (conv -> folded BN -> swish) for verification."""
    y = jax.lax.conv_general_dilated(
        x_nchw, w_oihw, window_strides=(1, 1), padding="VALID",
        dimension_numbers=("NCHW", "OIHW", "NCHW"))
    y = y * bn_scale[None, :, None, None] + bn_bias[None, :, None, None]
    return y * jax.nn.sigmoid(y)


if __name__ == "__main__":
    # Small shapes consistent with the module defaults:
    # batch=2, ch_in=4, ch_out=8, spatial=16, filter_size=3, stride=1, pad=0.
    N, CIN, COUT, H, W, K = 2, 4, 8, 16, 16, 3

    key = jax.random.PRNGKey(0)
    kx, kw, kg, kb, km, kv = jax.random.split(key, 6)

    x = jax.random.normal(kx, (N, CIN, H, W), dtype=jnp.float32)
    # Conv weight in PyTorch layout (Cout, Cin, KH, KW).
    w_oihw = 0.1 * jax.random.normal(kw, (COUT, CIN, K, K), dtype=jnp.float32)

    # Deterministic BatchNorm parameters / running stats (eval mode).
    gamma = 1.0 + 0.1 * jax.random.normal(kg, (COUT,), dtype=jnp.float32)
    beta = 0.1 * jax.random.normal(kb, (COUT,), dtype=jnp.float32)
    running_mean = 0.1 * jax.random.normal(km, (COUT,), dtype=jnp.float32)
    running_var = jnp.abs(jax.random.normal(kv, (COUT,), dtype=jnp.float32)) + 0.5
    eps = 1e-5

    bn_scale = gamma / jnp.sqrt(running_var + eps)
    bn_bias = beta - running_mean * bn_scale

    out = conv_bn_swish(x, w_oihw, bn_scale, bn_bias)
    out = jax.block_until_ready(out)

    ref = reference(x, w_oihw, bn_scale, bn_bias)
    assert out.shape == (N, COUT, H - K + 1, W - K + 1), out.shape
    assert jnp.allclose(out, ref, atol=1e-4, rtol=1e-4), float(
        jnp.max(jnp.abs(out - ref)))

    print("KERNEL_OK")
</pallas_src>

<mosaic_0001>
module attributes {stable_mosaic.version = 11 : i64} {
  func.func @conv_bn_swish_kernel(%arg0: memref<2x8x384xf32, #tpu.memory_space<vmem>>, %arg1: memref<8x72xf32, #tpu.memory_space<vmem>>, %arg2: memref<8x1xf32, #tpu.memory_space<vmem>>, %arg3: memref<2x8x256xf32, #tpu.memory_space<vmem>>, %arg4: memref<72x256xf32, #tpu.memory_space<vmem>>) attributes {dimension_semantics = [], scalar_prefetch = 0 : i64, scratch_operands = 1 : i64, tpu.core_type = #tpu.core_type<tc>} {
    %c0 = arith.constant 0 : index
    %c0_0 = arith.constant 0 : index
    %0 = vector.load %arg1[%c0, %c0_0] : memref<8x72xf32, #tpu.memory_space<vmem>>, vector<8x72xf32>
    %c0_1 = arith.constant 0 : index
    %c0_2 = arith.constant 0 : index
    %1 = vector.load %arg2[%c0_1, %c0_2] : memref<8x1xf32, #tpu.memory_space<vmem>>, vector<8x1xf32>
    %c0_3 = arith.constant 0 : index
    %c0_4 = arith.constant 0 : index
    %c0_5 = arith.constant 0 : index
    %2 = vector.load %arg0[%c0_3, %c0_4, %c0_5] : memref<2x8x384xf32, #tpu.memory_space<vmem>>, vector<1x8x256xf32>
    %3 = vector.shape_cast %2 : vector<1x8x256xf32> to vector<8x256xf32>
    %c0_6 = arith.constant 0 : index
    %c0_7 = arith.constant 0 : index
    %4 = vector.load %arg4[%c0_6, %c0_7] : memref<72x256xf32, #tpu.memory_space<vmem>>, vector<8x256xf32>
    tpu.vector_store %arg4[%c0_6, %c0_7], %3 {strides = array<i32>} : memref<72x256xf32, #tpu.memory_space<vmem>>, vector<8x256xf32>,
    %c0_8 = arith.constant 0 : index
    %c0_9 = arith.constant 0 : index
    %c1 = arith.constant 1 : index
    %5 = vector.load %arg0[%c0_8, %c0_9, %c1] : memref<2x8x384xf32, #tpu.memory_space<vmem>>, vector<1x8x256xf32>
    %6 = vector.shape_cast %5 : vector<1x8x256xf32> to vector<8x256xf32>
    %c8 = arith.constant 8 : index
    %c0_10 = arith.constant 0 : index
    %7 = vector.load %arg4[%c8, %c0_10] : memref<72x256xf32, #tpu.memory_space<vmem>>, vector<8x256xf32>
    tpu.vector_store %arg4[%c8, %c0_10], %6 {strides = array<i32>} : memref<72x256xf32, #tpu.memory_space<vmem>>, vector<8x256xf32>,
    %c0_11 = arith.constant 0 : index
    %c0_12 = arith.constant 0 : index
    %c2 = arith.constant 2 : index
    %8 = vector.load %arg0[%c0_11, %c0_12, %c2] : memref<2x8x384xf32, #tpu.memory_space<vmem>>, vector<1x8x256xf32>
    %9 = vector.shape_cast %8 : vector<1x8x256xf32> to vector<8x256xf32>
    %c16 = arith.constant 16 : index
    %c0_13 = arith.constant 0 : index
    %10 = vector.load %arg4[%c16, %c0_13] : memref<72x256xf32, #tpu.memory_space<vmem>>, vector<8x256xf32>
    tpu.vector_store %arg4[%c16, %c0_13], %9 {strides = array<i32>} : memref<72x256xf32, #tpu.memory_space<vmem>>, vector<8x256xf32>,
    %c0_14 = arith.constant 0 : index
    %c0_15 = arith.constant 0 : index
    %c16_16 = arith.constant 16 : index
    %11 = vector.load %arg0[%c0_14, %c0_15, %c16_16] : memref<2x8x384xf32, #tpu.memory_space<vmem>>, vector<1x8x256xf32>
    %12 = vector.shape_cast %11 : vector<1x8x256xf32> to vector<8x256xf32>
    %c24 = arith.constant 24 : index
    %c0_17 = arith.constant 0 : index
    %13 = vector.load %arg4[%c24, %c0_17] : memref<72x256xf32, #tpu.memory_space<vmem>>, vector<8x256xf32>
    tpu.vector_store %arg4[%c24, %c0_17], %12 {strides = array<i32>} : memref<72x256xf32, #tpu.memory_space<vmem>>, vector<8x256xf32>,
    %c0_18 = arith.constant 0 : index
    %c0_19 = arith.constant 0 : index
    %c17 = arith.constant 17 : index
    %14 = vector.load %arg0[%c0_18, %c0_19, %c17] : memref<2x8x384xf32, #tpu.memory_space<vmem>>, vector<1x8x256xf32>
    %15 = vector.shape_cast %14 : vector<1x8x256xf32> to vector<8x256xf32>
    %c32 = arith.constant 32 : index
    %c0_20 = arith.constant 0 : index
    %16 = vector.load %arg4[%c32, %c0_20] : memref<72x256xf32, #tpu.memory_space<vmem>>, vector<8x256xf32>
    tpu.vector_store %arg4[%c32, %c0_20], %15 {strides = array<i32>} : memref<72x256xf32, #tpu.memory_space<vmem>>, vector<8x256xf32>,
    %c0_21 = arith.constant 0 : index
    %c0_22 = arith.constant 0 : index
    %c18 = arith.constant 18 : index
    %17 = vector.load %arg0[%c0_21, %c0_22, %c18] : memref<2x8x384xf32, #tpu.memory_space<vmem>>, vector<1x8x256xf32>
    %18 = vector.shape_cast %17 : vector<1x8x256xf32> to vector<8x256xf32>
    %c40 = arith.constant 40 : index
    %c0_23 = arith.constant 0 : index
    %19 = vector.load %arg4[%c40, %c0_23] : memref<72x256xf32, #tpu.memory_space<vmem>>, vector<8x256xf32>
    tpu.vector_store %arg4[%c40, %c0_23], %18 {strides = array<i32>} : memref<72x256xf32, #tpu.memory_space<vmem>>, vector<8x256xf32>,
    %c0_24 = arith.constant 0 : index
    %c0_25 = arith.constant 0 : index
    %c32_26 = arith.constant 32 : index
    %20 = vector.load %arg0[%c0_24, %c0_25, %c32_26] : memref<2x8x384xf32, #tpu.memory_space<vmem>>, vector<1x8x256xf32>
    %21 = vector.shape_cast %20 : vector<1x8x256xf32> to vector<8x256xf32>
    %c48 = arith.constant 48 : index
    %c0_27 = arith.constant 0 : index
    %22 = vector.load %arg4[%c48, %c0_27] : memref<72x256xf32, #tpu.memory_space<vmem>>, vector<8x256xf32>
    tpu.vector_store %arg4[%c48, %c0_27], %21 {strides = array<i32>} : memref<72x256xf32, #tpu.memory_space<vmem>>, vector<8x256xf32>,
    %c0_28 = arith.constant 0 : index
    %c0_29 = arith.constant 0 : index
    %c33 = arith.constant 33 : index
    %23 = vector.load %arg0[%c0_28, %c0_29, %c33] : memref<2x8x384xf32, #tpu.memory_space<vmem>>, vector<1x8x256xf32>
    %24 = vector.shape_cast %23 : vector<1x8x256xf32> to vector<8x256xf32>
    %c56 = arith.constant 56 : index
    %c0_30 = arith.constant 0 : index
    %25 = vector.load %arg4[%c56, %c0_30] : memref<72x256xf32, #tpu.memory_space<vmem>>, vector<8x256xf32>
    tpu.vector_store %arg4[%c56, %c0_30], %24 {strides = array<i32>} : memref<72x256xf32, #tpu.memory_space<vmem>>, vector<8x256xf32>,
    %c0_31 = arith.constant 0 : index
    %c0_32 = arith.constant 0 : index
    %c34 = arith.constant 34 : index
    %26 = vector.load %arg0[%c0_31, %c0_32, %c34] : memref<2x8x384xf32, #tpu.memory_space<vmem>>, vector<1x8x256xf32>
    %27 = vector.shape_cast %26 : vector<1x8x256xf32> to vector<8x256xf32>
    %c64 = arith.constant 64 : index
    %c0_33 = arith.constant 0 : index
    %28 = vector.load %arg4[%c64, %c0_33] : memref<72x256xf32, #tpu.memory_space<vmem>>, vector<8x256xf32>
    tpu.vector_store %arg4[%c64, %c0_33], %27 {strides = array<i32>} : memref<72x256xf32, #tpu.memory_space<vmem>>, vector<8x256xf32>,
    %c0_34 = arith.constant 0 : index
    %c0_35 = arith.constant 0 : index
    %29 = vector.load %arg4[%c0_34, %c0_35] : memref<72x256xf32, #tpu.memory_space<vmem>>, vector<72x256xf32>
    %cst = arith.constant dense<0.000000e+00> : vector<8x256xf32>
    %30 = tpu.matmul %0, %29, %cst {dimension_numbers = #tpu.dot_dimension_numbers<[1], [0], [0], [1], [0, 0, 1, 1], [], []>} : vector<8x72xf32>, vector<72x256xf32>, vector<8x256xf32> -> vector<8x256xf32>
    %31 = vector.broadcast %1 : vector<8x1xf32> to vector<8x256xf32>
    %32 = arith.addf %30, %31 : vector<8x256xf32>
    %cst_36 = arith.constant 0.000000e+00 : f32
    %33 = vector.broadcast %cst_36 : f32 to vector<8x256xf32>
    %34 = arith.subf %33, %32 : vector<8x256xf32>
    %35 = math.exp %34 : vector<8x256xf32>
    %cst_37 = arith.constant 1.000000e+00 : f32
    %36 = vector.broadcast %cst_37 : f32 to vector<8x256xf32>
    %37 = arith.addf %36, %35 : vector<8x256xf32>
    %38 = tpu.reciprocal %37 : vector<8x256xf32> -> vector<8x256xf32>
    %39 = arith.mulf %32, %38 : vector<8x256xf32>
    %c0_38 = arith.constant 0 : index
    %c0_39 = arith.constant 0 : index
    %c0_40 = arith.constant 0 : index
    %40 = vector.load %arg3[%c0_38, %c0_39, %c0_40] : memref<2x8x256xf32, #tpu.memory_space<vmem>>, vector<1x8x256xf32>
    %41 = vector.shape_cast %40 : vector<1x8x256xf32> to vector<8x256xf32>
    %42 = vector.shape_cast %39 : vector<8x256xf32> to vector<1x8x256xf32>
    tpu.vector_store %arg3[%c0_38, %c0_39, %c0_40], %42 {strides = array<i32>} : memref<2x8x256xf32, #tpu.memory_space<vmem>>, vector<1x8x256xf32>,
    %c1_41 = arith.constant 1 : index
    %c0_42 = arith.constant 0 : index
    %c0_43 = arith.constant 0 : index
    %43 = vector.load %arg0[%c1_41, %c0_42, %c0_43] : memref<2x8x384xf32, #tpu.memory_space<vmem>>, vector<1x8x256xf32>
    %44 = vector.shape_cast %43 : vector<1x8x256xf32> to vector<8x256xf32>
    %c0_44 = arith.constant 0 : index
    %c0_45 = arith.constant 0 : index
    %45 = vector.load %arg4[%c0_44, %c0_45] : memref<72x256xf32, #tpu.memory_space<vmem>>, vector<8x256xf32>
    tpu.vector_store %arg4[%c0_44, %c0_45], %44 {strides = array<i32>} : memref<72x256xf32, #tpu.memory_space<vmem>>, vector<8x256xf32>,
    %c1_46 = arith.constant 1 : index
    %c0_47 = arith.constant 0 : index
    %c1_48 = arith.constant 1 : index
    %46 = vector.load %arg0[%c1_46, %c0_47, %c1_48] : memref<2x8x384xf32, #tpu.memory_space<vmem>>, vector<1x8x256xf32>
    %47 = vector.shape_cast %46 : vector<1x8x256xf32> to vector<8x256xf32>
    %c8_49 = arith.constant 8 : index
    %c0_50 = arith.constant 0 : index
    %48 = vector.load %arg4[%c8_49, %c0_50] : memref<72x256xf32, #tpu.memory_space<vmem>>, vector<8x256xf32>
    tpu.vector_store %arg4[%c8_49, %c0_50], %47 {strides = array<i32>} : memref<72x256xf32, #tpu.memory_space<vmem>>, vector<8x256xf32>,
    %c1_51 = arith.constant 1 : index
    %c0_52 = arith.constant 0 : index
    %c2_53 = arith.constant 2 : index
    %49 = vector.load %arg0[%c1_51, %c0_52, %c2_53] : memref<2x8x384xf32, #tpu.memory_space<vmem>>, vector<1x8x256xf32>
    %50 = vector.shape_cast %49 : vector<1x8x256xf32> to vector<8x256xf32>
    %c16_54 = arith.constant 16 : index
    %c0_55 = arith.constant 0 : index
    %51 = vector.load %arg4[%c16_54, %c0_55] : memref<72x256xf32, #tpu.memory_space<vmem>>, vector<8x256xf32>
    tpu.vector_store %arg4[%c16_54, %c0_55], %50 {strides = array<i32>} : memref<72x256xf32, #tpu.memory_space<vmem>>, vector<8x256xf32>,
    %c1_56 = arith.constant 1 : index
    %c0_57 = arith.constant 0 : index
    %c16_58 = arith.constant 16 : index
    %52 = vector.load %arg0[%c1_56, %c0_57, %c16_58] : memref<2x8x384xf32, #tpu.memory_space<vmem>>, vector<1x8x256xf32>
    %53 = vector.shape_cast %52 : vector<1x8x256xf32> to vector<8x256xf32>
    %c24_59 = arith.constant 24 : index
    %c0_60 = arith.constant 0 : index
    %54 = vector.load %arg4[%c24_59, %c0_60] : memref<72x256xf32, #tpu.memory_space<vmem>>, vector<8x256xf32>
    tpu.vector_store %arg4[%c24_59, %c0_60], %53 {strides = array<i32>} : memref<72x256xf32, #tpu.memory_space<vmem>>, vector<8x256xf32>,
    %c1_61 = arith.constant 1 : index
    %c0_62 = arith.constant 0 : index
    %c17_63 = arith.constant 17 : index
    %55 = vector.load %arg0[%c1_61, %c0_62, %c17_63] : memref<2x8x384xf32, #tpu.memory_space<vmem>>, vector<1x8x256xf32>
    %56 = vector.shape_cast %55 : vector<1x8x256xf32> to vector<8x256xf32>
    %c32_64 = arith.constant 32 : index
    %c0_65 = arith.constant 0 : index
    %57 = vector.load %arg4[%c32_64, %c0_65] : memref<72x256xf32, #tpu.memory_space<vmem>>, vector<8x256xf32>
    tpu.vector_store %arg4[%c32_64, %c0_65], %56 {strides = array<i32>} : memref<72x256xf32, #tpu.memory_space<vmem>>, vector<8x256xf32>,
    %c1_66 = arith.constant 1 : index
    %c0_67 = arith.constant 0 : index
    %c18_68 = arith.constant 18 : index
    %58 = vector.load %arg0[%c1_66, %c0_67, %c18_68] : memref<2x8x384xf32, #tpu.memory_space<vmem>>, vector<1x8x256xf32>
    %59 = vector.shape_cast %58 : vector<1x8x256xf32> to vector<8x256xf32>
    %c40_69 = arith.constant 40 : index
    %c0_70 = arith.constant 0 : index
    %60 = vector.load %arg4[%c40_69, %c0_70] : memref<72x256xf32, #tpu.memory_space<vmem>>, vector<8x256xf32>
    tpu.vector_store %arg4[%c40_69, %c0_70], %59 {strides = array<i32>} : memref<72x256xf32, #tpu.memory_space<vmem>>, vector<8x256xf32>,
    %c1_71 = arith.constant 1 : index
    %c0_72 = arith.constant 0 : index
    %c32_73 = arith.constant 32 : index
    %61 = vector.load %arg0[%c1_71, %c0_72, %c32_73] : memref<2x8x384xf32, #tpu.memory_space<vmem>>, vector<1x8x256xf32>
    %62 = vector.shape_cast %61 : vector<1x8x256xf32> to vector<8x256xf32>
    %c48_74 = arith.constant 48 : index
    %c0_75 = arith.constant 0 : index
    %63 = vector.load %arg4[%c48_74, %c0_75] : memref<72x256xf32, #tpu.memory_space<vmem>>, vector<8x256xf32>
    tpu.vector_store %arg4[%c48_74, %c0_75], %62 {strides = array<i32>} : memref<72x256xf32, #tpu.memory_space<vmem>>, vector<8x256xf32>,
    %c1_76 = arith.constant 1 : index
    %c0_77 = arith.constant 0 : index
    %c33_78 = arith.constant 33 : index
    %64 = vector.load %arg0[%c1_76, %c0_77, %c33_78] : memref<2x8x384xf32, #tpu.memory_space<vmem>>, vector<1x8x256xf32>
    %65 = vector.shape_cast %64 : vector<1x8x256xf32> to vector<8x256xf32>
    %c56_79 = arith.constant 56 : index
    %c0_80 = arith.constant 0 : index
    %66 = vector.load %arg4[%c56_79, %c0_80] : memref<72x256xf32, #tpu.memory_space<vmem>>, vector<8x256xf32>
    tpu.vector_store %arg4[%c56_79, %c0_80], %65 {strides = array<i32>} : memref<72x256xf32, #tpu.memory_space<vmem>>, vector<8x256xf32>,
    %c1_81 = arith.constant 1 : index
    %c0_82 = arith.constant 0 : index
    %c34_83 = arith.constant 34 : index
    %67 = vector.load %arg0[%c1_81, %c0_82, %c34_83] : memref<2x8x384xf32, #tpu.memory_space<vmem>>, vector<1x8x256xf32>
    %68 = vector.shape_cast %67 : vector<1x8x256xf32> to vector<8x256xf32>
    %c64_84 = arith.constant 64 : index
    %c0_85 = arith.constant 0 : index
    %69 = vector.load %arg4[%c64_84, %c0_85] : memref<72x256xf32, #tpu.memory_space<vmem>>, vector<8x256xf32>
    tpu.vector_store %arg4[%c64_84, %c0_85], %68 {strides = array<i32>} : memref<72x256xf32, #tpu.memory_space<vmem>>, vector<8x256xf32>,
    %c0_86 = arith.constant 0 : index
    %c0_87 = arith.constant 0 : index
    %70 = vector.load %arg4[%c0_86, %c0_87] : memref<72x256xf32, #tpu.memory_space<vmem>>, vector<72x256xf32>
    %cst_88 = arith.constant dense<0.000000e+00> : vector<8x256xf32>
    %71 = tpu.matmul %0, %70, %cst_88 {dimension_numbers = #tpu.dot_dimension_numbers<[1], [0], [0], [1], [0, 0, 1, 1], [], []>} : vector<8x72xf32>, vector<72x256xf32>, vector<8x256xf32> -> vector<8x256xf32>
    %72 = vector.broadcast %1 : vector<8x1xf32> to vector<8x256xf32>
    %73 = arith.addf %71, %72 : vector<8x256xf32>
    %cst_89 = arith.constant 0.000000e+00 : f32
    %74 = vector.broadcast %cst_89 : f32 to vector<8x256xf32>
    %75 = arith.subf %74, %73 : vector<8x256xf32>
    %76 = math.exp %75 : vector<8x256xf32>
    %cst_90 = arith.constant 1.000000e+00 : f32
    %77 = vector.broadcast %cst_90 : f32 to vector<8x256xf32>
    %78 = arith.addf %77, %76 : vector<8x256xf32>
    %79 = tpu.reciprocal %78 : vector<8x256xf32> -> vector<8x256xf32>
    %80 = arith.mulf %73, %79 : vector<8x256xf32>
    %c1_91 = arith.constant 1 : index
    %c0_92 = arith.constant 0 : index
    %c0_93 = arith.constant 0 : index
    %81 = vector.load %arg3[%c1_91, %c0_92, %c0_93] : memref<2x8x256xf32, #tpu.memory_space<vmem>>, vector<1x8x256xf32>
    %82 = vector.shape_cast %81 : vector<1x8x256xf32> to vector<8x256xf32>
    %83 = vector.shape_cast %80 : vector<8x256xf32> to vector<1x8x256xf32>
    tpu.vector_store %arg3[%c1_91, %c0_92, %c0_93], %83 {strides = array<i32>} : memref<2x8x256xf32, #tpu.memory_space<vmem>>, vector<1x8x256xf32>,
    return
  }
}

</mosaic_0001>

<llo_original>
// kernel: tpu_custom_call.1
$region0: #{tpu_custom_call.1}
  #allocation0 [shape = 'u32[]', space=smem, size = 0x4, offset = 0x4, fixed_abs, tag = 'smem constant byte address 0x4 - core index']
  #allocation1 [shape = 'u32[144,128]{1,0:T(1,128)}', space=vmem, size = 0x12000, scoped, tag = 'internal scratch']
  #allocation2 [shape = 'f32[72,256]{1,0:T(8,128)}', space=vmem, size = 0x12000, scoped, tag = 'scratch operand']
  %s0 = inlined_call_operand.hbm [shape: f32[2,8,384], index: 0, kind: input, shape index: {}]
  %s1 = inlined_call_operand.vmem [shape: f32[8,72], index: 1, kind: input, shape index: {}]
  %s2 = inlined_call_operand.vmem [shape: f32[8,1], index: 2, kind: input, shape index: {}]
  %s3 = inlined_call_operand.hbm [shape: f32[2,8,256], index: 3, kind: output, shape index: {}]
  %s4 = sld [smem:[#allocation0]]
  $region26: #{tpu_custom_call.1} parent=0
    _
  %s6 = ssub.s32 1, %s4
  %s7 = scalar_select 0, %s6, %s4
  $region1: #{tpu_custom_call.1} parent=0
    #allocation3 [shape = 'u8[24576]{0}', space=vmem, size = 0x6000, scoped, tag = 'input window, operand 0, single buffered']
    #allocation4 [shape = 's32[1]{0}', space=sflag, size = 0x4, scoped, tag = 'scoped memory for tpu_custom_call.1']
    #allocation5 [shape = 's32[1]{0}', space=sflag, size = 0x4, scoped, tag = 'scoped memory for tpu_custom_call.1']
    #allocation6 [shape = 'u8[16384]{0}', space=vmem, size = 0x4000, scoped, tag = 'output window, operand 0, single buffered']
    %8 = vsyncpa [#allocation4], 0
    %9 = vsyncpa [#allocation5], 0
    // Predicated region
    $region2: #{tpu_custom_call.1} parent=1 // pred_check
      _
    $region3: #{tpu_custom_call.1} parent=1 // pred_check_branch
      %11 = sbr.rel (0) target = $region5
    $region4: #{tpu_custom_call.1} parent=1 // pred_region
      %s13 = ssub.s32 768, 768
      %14 = vsyncadd [#allocation4], %s13
      %s15 = sshll.u32 [#allocation3], 4
      %s16 = int_to_ptr.vmem [resolvable:$true] %s15
      %21 = dma.hbm_to_vmem [thread:$0]  %s0, 768, %s16, [#allocation4], 384, 384, 24
    $region5: #{tpu_custom_call.1} parent=1 // pred_fallthru
      _
    // Predicated region
    $region6: #{tpu_custom_call.1} parent=1 // pred_check
      _
    $region7: #{tpu_custom_call.1} parent=1 // pred_check_branch
      %23 = sbr.rel (0) target = $region9
    $region8: #{tpu_custom_call.1} parent=1 // pred_region
      _
    $region9: #{tpu_custom_call.1} parent=1 // pred_fallthru
      _
    // Predicated region
    $region10: #{tpu_custom_call.1} parent=1 // pred_check
      _
    $region11: #{tpu_custom_call.1} parent=1 // pred_check_branch
      %25 = sbr.rel (0) target = $region13
    $region12: #{tpu_custom_call.1} parent=1 // pred_region
      _
    $region13: #{tpu_custom_call.1} parent=1 // pred_fallthru
      _
    // Predicated region
    $region14: #{tpu_custom_call.1} parent=1 // pred_check
      _
    $region15: #{tpu_custom_call.1} parent=1 // pred_check_branch
      %27 = sbr.rel (0) target = $region17
    $region16: #{tpu_custom_call.1} parent=1 // pred_region
      %28 = dma.done [#allocation4], 768
    $region17: #{tpu_custom_call.1} parent=1 // pred_fallthru
      _
    %v29 = vld [vmem:[%s1] sm:$0xff]
    %v30 = vld [vmem:[%s2] sm:$0xff]
    %v31 = vld [vmem:[#allocation3] sm:$0xff]
    %v32 = vld [vmem:[#allocation3 + $0x8] sm:$0xff]
    %33 = vst [vmem:[#allocation2] sm:$0xff] %v31
    %34 = vst [vmem:[#allocation2 + $0x8] sm:$0xff] %v32
    %v35 = vld [vmem:[#allocation3] sm:$0xff]
    %v36 = vld [vmem:[#allocation3 + $0x8] sm:$0xff]
    %v37 = vld [vmem:[#allocation3 + $0x10] sm:$0xff]
    %41 = vrot.lane.b32.xlu0 %v35, 127
    %v42 = vpop.permute.xlu0 %41
    %43 = vrot.lane.b32.xlu0 %v36, 127
    %v44 = vpop.permute.xlu0 %43
    %45 = vrot.lane.b32.xlu0 %v37, 127
    %v46 = vpop.permute.xlu0 %45
    %vm47 = vcmask 1039360
    %v48 = vsel %vm47, %v42, %v44
    %v49 = vsel %vm47, %v44, %v46
    %52 = vst [vmem:[#allocation2 + $0x10] sm:$0xff] %v48
    %53 = vst [vmem:[#allocation2 + $0x18] sm:$0xff] %v49
    %v54 = vld [vmem:[#allocation3] sm:$0xff]
    %v55 = vld [vmem:[#allocation3 + $0x8] sm:$0xff]
    %v56 = vld [vmem:[#allocation3 + $0x10] sm:$0xff]
    %60 = vrot.lane.b32.xlu0 %v54, 126
    %v61 = vpop.permute.xlu0 %60
    %62 = vrot.lane.b32.xlu0 %v55, 126
    %v63 = vpop.permute.xlu0 %62
    %64 = vrot.lane.b32.xlu0 %v56, 126
    %v65 = vpop.permute.xlu0 %64
    %vm66 = vcmask 1031168
    %v67 = vsel %vm66, %v61, %v63
    %v68 = vsel %vm66, %v63, %v65
    %71 = vst [vmem:[#allocation2 + $0x20] sm:$0xff] %v67
    %72 = vst [vmem:[#allocation2 + $0x28] sm:$0xff] %v68
    %v73 = vld [vmem:[#allocation3] sm:$0xff]
    %v74 = vld [vmem:[#allocation3 + $0x8] sm:$0xff]
    %v75 = vld [vmem:[#allocation3 + $0x10] sm:$0xff]
    %79 = vrot.lane.b32.xlu0 %v73, 112
    %v80 = vpop.permute.xlu0 %79
    %81 = vrot.lane.b32.xlu0 %v74, 112
    %v82 = vpop.permute.xlu0 %81
    %83 = vrot.lane.b32.xlu0 %v75, 112
    %v84 = vpop.permute.xlu0 %83
    %vm85 = vcmask 916480
    %v86 = vsel %vm85, %v80, %v82
    %v87 = vsel %vm85, %v82, %v84
    %90 = vst [vmem:[#allocation2 + $0x30] sm:$0xff] %v86
    %91 = vst [vmem:[#allocation2 + $0x38] sm:$0xff] %v87
    %v92 = vld [vmem:[#allocation3] sm:$0xff]
    %v93 = vld [vmem:[#allocation3 + $0x8] sm:$0xff]
    %v94 = vld [vmem:[#allocation3 + $0x10] sm:$0xff]
    %98 = vrot.lane.b32.xlu0 %v92, 111
    %v99 = vpop.permute.xlu0 %98
    %100 = vrot.lane.b32.xlu0 %v93, 111
    %v101 = vpop.permute.xlu0 %100
    %102 = vrot.lane.b32.xlu0 %v94, 111
    %v103 = vpop.permute.xlu0 %102
    %vm104 = vcmask 908288
    %v105 = vsel %vm104, %v99, %v101
    %v106 = vsel %vm104, %v101, %v103
    %109 = vst [vmem:[#allocation2 + $0x40] sm:$0xff] %v105
    %110 = vst [vmem:[#allocation2 + $0x48] sm:$0xff] %v106
    %v111 = vld [vmem:[#allocation3] sm:$0xff]
    %v112 = vld [vmem:[#allocation3 + $0x8] sm:$0xff]
    %v113 = vld [vmem:[#allocation3 + $0x10] sm:$0xff]
    %117 = vrot.lane.b32.xlu0 %v111, 110
    %v118 = vpop.permute.xlu0 %117
    %119 = vrot.lane.b32.xlu0 %v112, 110
    %v120 = vpop.permute.xlu0 %119
    %121 = vrot.lane.b32.xlu0 %v113, 110
    %v122 = vpop.permute.xlu0 %121
    %vm123 = vcmask 900096
    %v124 = vsel %vm123, %v118, %v120
    %v125 = vsel %vm123, %v120, %v122
    %128 = vst [vmem:[#allocation2 + $0x50] sm:$0xff] %v124
    %129 = vst [vmem:[#allocation2 + $0x58] sm:$0xff] %v125
    %v130 = vld [vmem:[#allocation3] sm:$0xff]
    %v131 = vld [vmem:[#allocation3 + $0x8] sm:$0xff]
    %v132 = vld [vmem:[#allocation3 + $0x10] sm:$0xff]
    %136 = vrot.lane.b32.xlu0 %v130, 96
    %v137 = vpop.permute.xlu0 %136
    %138 = vrot.lane.b32.xlu0 %v131, 96
    %v139 = vpop.permute.xlu0 %138
    %140 = vrot.lane.b32.xlu0 %v132, 96
    %v141 = vpop.permute.xlu0 %140
    %vm142 = vcmask 785408
    %v143 = vsel %vm142, %v137, %v139
    %v144 = vsel %vm142, %v139, %v141
    %147 = vst [vmem:[#allocation2 + $0x60] sm:$0xff] %v143
    %148 = vst [vmem:[#allocation2 + $0x68] sm:$0xff] %v144
    %v149 = vld [vmem:[#allocation3] sm:$0xff]
    %v150 = vld [vmem:[#allocation3 + $0x8] sm:$0xff]
    %v151 = vld [vmem:[#allocation3 + $0x10] sm:$0xff]
    %155 = vrot.lane.b32.xlu0 %v149, 95
    %v156 = vpop.permute.xlu0 %155
    %157 = vrot.lane.b32.xlu0 %v150, 95
    %v158 = vpop.permute.xlu0 %157
    %159 = vrot.lane.b32.xlu0 %v151, 95
    %v160 = vpop.permute.xlu0 %159
    %vm161 = vcmask 777216
    %v162 = vsel %vm161, %v156, %v158
    %v163 = vsel %vm161, %v158, %v160
    %166 = vst [vmem:[#allocation2 + $0x70] sm:$0xff] %v162
    %167 = vst [vmem:[#allocation2 + $0x78] sm:$0xff] %v163
    %v168 = vld [vmem:[#allocation3] sm:$0xff]
    %v169 = vld [vmem:[#allocation3 + $0x8] sm:$0xff]
    %v170 = vld [vmem:[#allocation3 + $0x10] sm:$0xff]
    %174 = vrot.lane.b32.xlu0 %v168, 94
    %v175 = vpop.permute.xlu0 %174
    %176 = vrot.lane.b32.xlu0 %v169, 94
    %v177 = vpop.permute.xlu0 %176
    %178 = vrot.lane.b32.xlu0 %v170, 94
    %v179 = vpop.permute.xlu0 %178
    %vm180 = vcmask 769024
    %v181 = vsel %vm180, %v175, %v177
    %v182 = vsel %vm180, %v177, %v179
    %185 = vst [vmem:[#allocation2 + $0x80] sm:$0xff] %v181
    %186 = vst [vmem:[#allocation2 + $0x88] sm:$0xff] %v182
    %v187 = vld [vmem:[#allocation2] sm:$0xff]
    %v188 = vld [vmem:[#allocation2 + $0x8] sm:$0xff]
    %v189 = vld [vmem:[#allocation2 + $0x10] sm:$0xff]
    %v190 = vld [vmem:[#allocation2 + $0x18] sm:$0xff]
    %v191 = vld [vmem:[#allocation2 + $0x20] sm:$0xff]
    %v192 = vld [vmem:[#allocation2 + $0x28] sm:$0xff]
    %v193 = vld [vmem:[#allocation2 + $0x30] sm:$0xff]
    %v194 = vld [vmem:[#allocation2 + $0x38] sm:$0xff]
    %v195 = vld [vmem:[#allocation2 + $0x40] sm:$0xff]
    %v196 = vld [vmem:[#allocation2 + $0x48] sm:$0xff]
    %v197 = vld [vmem:[#allocation2 + $0x50] sm:$0xff]
    %v198 = vld [vmem:[#allocation2 + $0x58] sm:$0xff]
    %v199 = vld [vmem:[#allocation2 + $0x60] sm:$0xff]
    %v200 = vld [vmem:[#allocation2 + $0x68] sm:$0xff]
    %v201 = vld [vmem:[#allocation2 + $0x70] sm:$0xff]
    %v202 = vld [vmem:[#allocation2 + $0x78] sm:$0xff]
    %v203 = vld [vmem:[#allocation2 + $0x80] sm:$0xff]
    %v204 = vld [vmem:[#allocation2 + $0x88] sm:$0xff]
    %206 = vset.pattern.permute.xlu0 0
    %207 = vperm.xlu0 %206, %v30
    %v208 = vpop.permute.xlu0 %207
    %vm210 = vcmask 588800
    %v212 = vsel %vm210, %v29, 0
    %214 = vmatprep.subr.mxu0 %v188
    %215 = vmatpush1.msra.mxu0 %v187
    %216 = vmatprep.subr.mxu0 %v190
    %217 = vmatpush1.msra.mxu0 %v189
    %218 = vmatprep.subr.mxu0 %v192
    %219 = vmatpush1.msra.mxu0 %v191
    %220 = vmatprep.subr.mxu0 %v194
    %221 = vmatpush1.msra.mxu0 %v193
    %222 = vmatprep.subr.mxu0 %v196
    %223 = vmatpush1.msra.mxu0 %v195
    %224 = vmatprep.subr.mxu0 %v198
    %225 = vmatpush1.msra.mxu0 %v197
    %226 = vmatprep.subr.mxu0 %v200
    %227 = vmatpush1.msra.mxu0 %v199
    %228 = vmatprep.subr.mxu0 %v202
    %229 = vmatpush1.msra.mxu0 %v201
    %230 = vmatprep.subr.mxu0 %v204
    %231 = vmatpush1.msra.mxu0 %v203
    %232 = vmatprep.subr.mxu0 0.0
    %233 = vmatpush1.msra.mxu0 0.0
    %234 = vmatprep.subr.mxu0 0.0
    %235 = vmatpush1.msra.mxu0 0.0
    %236 = vmatprep.subr.mxu0 0.0
    %237 = vmatpush1.msra.mxu0 0.0
    %238 = vmatprep.subr.mxu0 0.0
    %239 = vmatpush1.msra.mxu0 0.0
    %240 = vmatprep.subr.mxu0 0.0
    %241 = vmatpush1.msra.mxu0 0.0
    %242 = vmatprep.subr.mxu0 0.0
    %243 = vmatpush1.msra.mxu0 0.0
    %244 = vmatprep.subr.mxu0 0.0
    %245 = vmatpush1.msra.mxu0 0.0
    %246 = vmatprep.subr.mxu0 0.0
    %247 = vmatpush1.msra.mxu0 0.0
    %248 = vmatprep.subr.mxu0 0.0
    %249 = vmatpush1.msra.mxu0 0.0
    %250 = vmatprep.subr.mxu0 0.0
    %251 = vmatpush1.msra.mxu0 0.0
    %252 = vmatprep.subr.mxu0 0.0
    %253 = vmatpush1.msra.mxu0 0.0
    %254 = vmatprep.subr.mxu0 0.0
    %255 = vmatpush1.msra.mxu0 0.0
    %256 = vmatprep.subr.mxu0 0.0
    %257 = vmatpush1.msra.mxu0 0.0
    %258 = vmatprep.subr.mxu0 0.0
    %259 = vmatpush1.msra.mxu0 0.0
    %260 = vmatprep.subr.mxu0 0.0
    %261 = vmatpush1.msra.mxu0 0.0
    %262 = vmatprep.subr.mxu0 0.0
    %263 = vmatpush1.msra.mxu0 0.0
    %264 = vmatprep.subr.mxu0 0.0
    %265 = vmatpush1.msra.mxu0 0.0
    %266 = vmatprep.subr.mxu0 0.0
    %267 = vmatpush1.msra.mxu0 0.0
    %268 = vmatprep.subr.mxu0 0.0
    %269 = vmatpush1.msra.mxu0 0.0
    %270 = vmatprep.subr.mxu0 0.0
    %271 = vmatpush1.msra.mxu0 0.0
    %272 = vmatprep.subr.mxu0 0.0
    %273 = vmatpush1.msra.mxu0 0.0
    %274 = vmatprep.subr.mxu0 0.0
    %275 = vmatpush1.msra.mxu0 0.0
    %276 = vmatprep.subr.mxu0 0.0
    %277 = vmatpush1.msra.mxu0 0.0
    %278 = vmatprep.mubr.f32.mxu0 0.0
    %279 = vmatmul.mubr.f32.gmra.mrb[0].mxu0 %v212
    %v280 = vpop.f32.mrb[0].mxu0
    %v281 = vadd.f32 %v208, %v280
    %v282 = vpop.f32.mrb[0].mxu0
    %v283 = vadd.f32 %v208, %v282
    %284 = vdwg.mxu0
    %v285 = vsub.f32 0.0, %v281
    %v286 = vsub.f32 0.0, %v283
    %v287 = vmul.f32 %v285, 1.442695
    %v288 = vpow.pop %v287
    %v289 = vmul.f32 %v286, 1.442695
    %v290 = vpow.pop %v289
    %v291 = vadd.f32 %v288, 1.0
    %v292 = vadd.f32 %v290, 1.0
    %v293 = vrcp.pop %v291
    %v294 = vrcp.pop %v292
    %v295 = vmul.f32 %v281, %v293
    %v296 = vmul.f32 %v283, %v294
    %297 = vst [vmem:[#allocation6] sm:$0xff] %v295
    %298 = vst [vmem:[#allocation6 + $0x8] sm:$0xff] %v296
    %s299 = scalar_lea.vmem [#allocation3], 24
    %v300 = vld [vmem:[%s299] sm:$0xff]
    %v301 = vld [vmem:[%s299 + $0x8] sm:$0xff]
    %302 = vst [vmem:[#allocation2] sm:$0xff] %v300
    %303 = vst [vmem:[#allocation2 + $0x8] sm:$0xff] %v301
    %v304 = vld [vmem:[%s299] sm:$0xff]
    %v305 = vld [vmem:[%s299 + $0x8] sm:$0xff]
    %v306 = vld [vmem:[%s299 + $0x10] sm:$0xff]
    %310 = vrot.lane.b32.xlu0 %v304, 127
    %v311 = vpop.permute.xlu0 %310
    %312 = vrot.lane.b32.xlu0 %v305, 127
    %v313 = vpop.permute.xlu0 %312
    %314 = vrot.lane.b32.xlu0 %v306, 127
    %v315 = vpop.permute.xlu0 %314
    %v316 = vsel %vm47, %v311, %v313
    %v317 = vsel %vm47, %v313, %v315
    %320 = vst [vmem:[#allocation2 + $0x10] sm:$0xff] %v316
    %321 = vst [vmem:[#allocation2 + $0x18] sm:$0xff] %v317
    %v322 = vld [vmem:[%s299] sm:$0xff]
    %v323 = vld [vmem:[%s299 + $0x8] sm:$0xff]
    %v324 = vld [vmem:[%s299 + $0x10] sm:$0xff]
    %328 = vrot.lane.b32.xlu0 %v322, 126
    %v329 = vpop.permute.xlu0 %328
    %330 = vrot.lane.b32.xlu0 %v323, 126
    %v331 = vpop.permute.xlu0 %330
    %332 = vrot.lane.b32.xlu0 %v324, 126
    %v333 = vpop.permute.xlu0 %332
    %v334 = vsel %vm66, %v329, %v331
    %v335 = vsel %vm66, %v331, %v333
    %338 = vst [vmem:[#allocation2 + $0x20] sm:$0xff] %v334
    %339 = vst [vmem:[#allocation2 + $0x28] sm:$0xff] %v335
    %v340 = vld [vmem:[%s299] sm:$0xff]
    %v341 = vld [vmem:[%s299 + $0x8] sm:$0xff]
    %v342 = vld [vmem:[%s299 + $0x10] sm:$0xff]
    %346 = vrot.lane.b32.xlu0 %v340, 112
    %v347 = vpop.permute.xlu0 %346
    %348 = vrot.lane.b32.xlu0 %v341, 112
    %v349 = vpop.permute.xlu0 %348
    %350 = vrot.lane.b32.xlu0 %v342, 112
    %v351 = vpop.permute.xlu0 %350
    %v352 = vsel %vm85, %v347, %v349
    %v353 = vsel %vm85, %v349, %v351
    %356 = vst [vmem:[#allocation2 + $0x30] sm:$0xff] %v352
    %357 = vst [vmem:[#allocation2 + $0x38] sm:$0xff] %v353
    %v358 = vld [vmem:[%s299] sm:$0xff]
    %v359 = vld [vmem:[%s299 + $0x8] sm:$0xff]
    %v360 = vld [vmem:[%s299 + $0x10] sm:$0xff]
    %364 = vrot.lane.b32.xlu0 %v358, 111
    %v365 = vpop.permute.xlu0 %364
    %366 = vrot.lane.b32.xlu0 %v359, 111
    %v367 = vpop.permute.xlu0 %366
    %368 = vrot.lane.b32.xlu0 %v360, 111
    %v369 = vpop.permute.xlu0 %368
    %v370 = vsel %vm104, %v365, %v367
    %v371 = vsel %vm104, %v367, %v369
    %374 = vst [vmem:[#allocation2 + $0x40] sm:$0xff] %v370
    %375 = vst [vmem:[#allocation2 + $0x48] sm:$0xff] %v371
    %v376 = vld [vmem:[%s299] sm:$0xff]
    %v377 = vld [vmem:[%s299 + $0x8] sm:$0xff]
    %v378 = vld [vmem:[%s299 + $0x10] sm:$0xff]
    %382 = vrot.lane.b32.xlu0 %v376, 110
    %v383 = vpop.permute.xlu0 %382
    %384 = vrot.lane.b32.xlu0 %v377, 110
    %v385 = vpop.permute.xlu0 %384
    %386 = vrot.lane.b32.xlu0 %v378, 110
    %v387 = vpop.permute.xlu0 %386
    %v388 = vsel %vm123, %v383, %v385
    %v389 = vsel %vm123, %v385, %v387
    %392 = vst [vmem:[#allocation2 + $0x50] sm:$0xff] %v388
    %393 = vst [vmem:[#allocation2 + $0x58] sm:$0xff] %v389
    %v394 = vld [vmem:[%s299] sm:$0xff]
    %v395 = vld [vmem:[%s299 + $0x8] sm:$0xff]
    %v396 = vld [vmem:[%s299 + $0x10] sm:$0xff]
    %400 = vrot.lane.b32.xlu0 %v394, 96
    %v401 = vpop.permute.xlu0 %400
    %402 = vrot.lane.b32.xlu0 %v395, 96
    %v403 = vpop.permute.xlu0 %402
    %404 = vrot.lane.b32.xlu0 %v396, 96
    %v405 = vpop.permute.xlu0 %404
    %v406 = vsel %vm142, %v401, %v403
    %v407 = vsel %vm142, %v403, %v405
    %410 = vst [vmem:[#allocation2 + $0x60] sm:$0xff] %v406
    %411 = vst [vmem:[#allocation2 + $0x68] sm:$0xff] %v407
    %v412 = vld [vmem:[%s299] sm:$0xff]
    %v413 = vld [vmem:[%s299 + $0x8] sm:$0xff]
    %v414 = vld [vmem:[%s299 + $0x10] sm:$0xff]
    %418 = vrot.lane.b32.xlu0 %v412, 95
    %v419 = vpop.permute.xlu0 %418
    %420 = vrot.lane.b32.xlu0 %v413, 95
    %v421 = vpop.permute.xlu0 %420
    %422 = vrot.lane.b32.xlu0 %v414, 95
    %v423 = vpop.permute.xlu0 %422
    %v424 = vsel %vm161, %v419, %v421
    %v425 = vsel %vm161, %v421, %v423
    %428 = vst [vmem:[#allocation2 + $0x70] sm:$0xff] %v424
    %429 = vst [vmem:[#allocation2 + $0x78] sm:$0xff] %v425
    %v430 = vld [vmem:[%s299] sm:$0xff]
    %v431 = vld [vmem:[%s299 + $0x8] sm:$0xff]
    %v432 = vld [vmem:[%s299 + $0x10] sm:$0xff]
    %436 = vrot.lane.b32.xlu0 %v430, 94
    %v437 = vpop.permute.xlu0 %436
    %438 = vrot.lane.b32.xlu0 %v431, 94
    %v439 = vpop.permute.xlu0 %438
    %440 = vrot.lane.b32.xlu0 %v432, 94
    %v441 = vpop.permute.xlu0 %440
    %v442 = vsel %vm180, %v437, %v439
    %v443 = vsel %vm180, %v439, %v441
    %446 = vst [vmem:[#allocation2 + $0x80] sm:$0xff] %v442
    %447 = vst [vmem:[#allocation2 + $0x88] sm:$0xff] %v443
    %v448 = vld [vmem:[#allocation2] sm:$0xff]
    %v449 = vld [vmem:[#allocation2 + $0x8] sm:$0xff]
    %v450 = vld [vmem:[#allocation2 + $0x10] sm:$0xff]
    %v451 = vld [vmem:[#allocation2 + $0x18] sm:$0xff]
    %v452 = vld [vmem:[#allocation2 + $0x20] sm:$0xff]
    %v453 = vld [vmem:[#allocation2 + $0x28] sm:$0xff]
    %v454 = vld [vmem:[#allocation2 + $0x30] sm:$0xff]
    %v455 = vld [vmem:[#allocation2 + $0x38] sm:$0xff]
    %v456 = vld [vmem:[#allocation2 + $0x40] sm:$0xff]
    %v457 = vld [vmem:[#allocation2 + $0x48] sm:$0xff]
    %v458 = vld [vmem:[#allocation2 + $0x50] sm:$0xff]
    %v459 = vld [vmem:[#allocation2 + $0x58] sm:$0xff]
    %v460 = vld [vmem:[#allocation2 + $0x60] sm:$0xff]
    %v461 = vld [vmem:[#allocation2 + $0x68] sm:$0xff]
    %v462 = vld [vmem:[#allocation2 + $0x70] sm:$0xff]
    %v463 = vld [vmem:[#allocation2 + $0x78] sm:$0xff]
    %v464 = vld [vmem:[#allocation2 + $0x80] sm:$0xff]
    %v465 = vld [vmem:[#allocation2 + $0x88] sm:$0xff]
    %466 = vmatprep.subr.mxu0 %v449
    %467 = vmatpush1.msra.mxu0 %v448
    %468 = vmatprep.subr.mxu0 %v451
    %469 = vmatpush1.msra.mxu0 %v450
    %470 = vmatprep.subr.mxu0 %v453
    %471 = vmatpush1.msra.mxu0 %v452
    %472 = vmatprep.subr.mxu0 %v455
    %473 = vmatpush1.msra.mxu0 %v454
    %474 = vmatprep.subr.mxu0 %v457
    %475 = vmatpush1.msra.mxu0 %v456
    %476 = vmatprep.subr.mxu0 %v459
    %477 = vmatpush1.msra.mxu0 %v458
    %478 = vmatprep.subr.mxu0 %v461
    %479 = vmatpush1.msra.mxu0 %v460
    %480 = vmatprep.subr.mxu0 %v463
    %481 = vmatpush1.msra.mxu0 %v462
    %482 = vmatprep.subr.mxu0 %v465
    %483 = vmatpush1.msra.mxu0 %v464
    %484 = vmatprep.subr.mxu0 0.0
    %485 = vmatpush1.msra.mxu0 0.0
    %486 = vmatprep.subr.mxu0 0.0
    %487 = vmatpush1.msra.mxu0 0.0
    %488 = vmatprep.subr.mxu0 0.0
    %489 = vmatpush1.msra.mxu0 0.0
    %490 = vmatprep.subr.mxu0 0.0
    %491 = vmatpush1.msra.mxu0 0.0
    %492 = vmatprep.subr.mxu0 0.0
    %493 = vmatpush1.msra.mxu0 0.0
    %494 = vmatprep.subr.mxu0 0.0
    %495 = vmatpush1.msra.mxu0 0.0
    %496 = vmatprep.subr.mxu0 0.0
    %497 = vmatpush1.msra.mxu0 0.0
    %498 = vmatprep.subr.mxu0 0.0
    %499 = vmatpush1.msra.mxu0 0.0
    %500 = vmatprep.subr.mxu0 0.0
    %501 = vmatpush1.msra.mxu0 0.0
    %502 = vmatprep.subr.mxu0 0.0
    %503 = vmatpush1.msra.mxu0 0.0
    %504 = vmatprep.subr.mxu0 0.0
    %505 = vmatpush1.msra.mxu0 0.0
    %506 = vmatprep.subr.mxu0 0.0
    %507 = vmatpush1.msra.mxu0 0.0
    %508 = vmatprep.subr.mxu0 0.0
    %509 = vmatpush1.msra.mxu0 0.0
    %510 = vmatprep.subr.mxu0 0.0
    %511 = vmatpush1.msra.mxu0 0.0
    %512 = vmatprep.subr.mxu0 0.0
    %513 = vmatpush1.msra.mxu0 0.0
    %514 = vmatprep.subr.mxu0 0.0
    %515 = vmatpush1.msra.mxu0 0.0
    %516 = vmatprep.subr.mxu0 0.0
    %517 = vmatpush1.msra.mxu0 0.0
    %518 = vmatprep.subr.mxu0 0.0
    %519 = vmatpush1.msra.mxu0 0.0
    %520 = vmatprep.subr.mxu0 0.0
    %521 = vmatpush1.msra.mxu0 0.0
    %522 = vmatprep.subr.mxu0 0.0
    %523 = vmatpush1.msra.mxu0 0.0
    %524 = vmatprep.subr.mxu0 0.0
    %525 = vmatpush1.msra.mxu0 0.0
    %526 = vmatprep.subr.mxu0 0.0
    %527 = vmatpush1.msra.mxu0 0.0
    %528 = vmatprep.subr.mxu0 0.0
    %529 = vmatpush1.msra.mxu0 0.0
    %530 = vmatprep.mubr.f32.mxu0 0.0
    %531 = vmatmul.mubr.f32.gmra.mrb[0].mxu0 %v212
    %v532 = vpop.f32.mrb[0].mxu0
    %v533 = vadd.f32 %v208, %v532
    %v534 = vpop.f32.mrb[0].mxu0
    %v535 = vadd.f32 %v208, %v534
    %536 = vdwg.mxu0
    %v537 = vsub.f32 0.0, %v533
    %v538 = vsub.f32 0.0, %v535
    %v539 = vmul.f32 %v537, 1.442695
    %v540 = vpow.pop %v539
    %v541 = vmul.f32 %v538, 1.442695
    %v542 = vpow.pop %v541
    %v543 = vadd.f32 %v540, 1.0
    %v544 = vadd.f32 %v542, 1.0
    %v545 = vrcp.pop %v543
    %v546 = vrcp.pop %v544
    %v547 = vmul.f32 %v533, %v545
    %v548 = vmul.f32 %v535, %v546
    %s549 = scalar_lea.vmem [#allocation6], 16
    %550 = vst [vmem:[%s549] sm:$0xff] %v547
    %551 = vst [vmem:[%s549 + $0x8] sm:$0xff] %v548
    // Predicated region
    $region18: #{tpu_custom_call.1} parent=1 // pred_check
      _
    $region19: #{tpu_custom_call.1} parent=1 // pred_check_branch
      %553 = sbr.rel (0) target = $region21
    $region20: #{tpu_custom_call.1} parent=1 // pred_region
      %s555 = ssub.s32 512, 512
      %556 = vsyncadd [#allocation5], %s555
      %s557 = sshll.u32 [#allocation6], 4
      %s558 = int_to_ptr.vmem [resolvable:$true] %s557
      %563 = dma.vmem_to_hbm [thread:$0]  %s558, 512, %s3, [#allocation5], 256, 256, 16
    $region21: #{tpu_custom_call.1} parent=1 // pred_fallthru
      _
    // Predicated region
    $region22: #{tpu_custom_call.1} parent=1 // pred_check
      _
    $region23: #{tpu_custom_call.1} parent=1 // pred_check_branch
      %565 = sbr.rel (0) target = $region25
    $region24: #{tpu_custom_call.1} parent=1 // pred_region
      %566 = dma.done [#allocation5], 512
    $region25: #{tpu_custom_call.1} parent=1 // pred_fallthru
      _
    %567 = vsyncpa [#allocation4], 1
    %568 = vsyncpa [#allocation5], 1

</llo_original>
